<compile_context>
chip_gen: v6e
topology: v6e:2x2x1
jax: 0.10.0
libtpu: 0.0.40
codegen_flags: <defaults>
</compile_context>

<pallas_src>
import functools

import jax
import jax.numpy as jnp
from jax.experimental import pallas as pl
from jax.experimental.pallas import tpu as pltpu

LANES = 128
MAX_ROWS_PER_TILE = 8192           # f32: 4 MiB per input tile
SMALL_N_FAST_PATH = 256 * 1024     # below this, skip the Pallas kernel
VMEM_LIMIT_BYTES = 40 << 20        # safe on v5e/v6e (128 MiB phys) and v7x (64 MiB phys)


def _device_has_two_tensorcores() -> bool:
    """True on chips with 2 TensorCores per device (v4 / v5p / v7x)."""
    try:
        kind = jax.devices()[0].device_kind.lower()
    except Exception:
        return False
    # Single-TC chips: v5e / v6e ("lite" variants).
    if "lite" in kind or "v5e" in kind or "v6e" in kind:
        return False
    return any(tag in kind for tag in ("v4", "v5p", "v5 p", "v7", "7x"))


def _mae_kernel(o_ref, t_ref, out_ref, acc_ref, *,
                rows, rows_per_tile, tiles_per_split, total_tiles, has_phantom):
    s = pl.program_id(0)          # split (parallel axis -> sharded across TCs)
    i = pl.program_id(1)          # tile within split (reduction axis)

    @pl.when(i == 0)
    def _init():
        acc_ref[...] = jnp.zeros_like(acc_ref)

    tile_idx = s * tiles_per_split + i
    last_tile = total_tiles - 1
    tail_rows = rows - last_tile * rows_per_tile   # valid rows in the last tile

    def _partial_sum(mask_rows):
        diff = jnp.abs(o_ref[...].astype(jnp.float32)
                       - t_ref[...].astype(jnp.float32))
        if mask_rows:
            # jnp.where SELECTS; garbage (even NaN/Inf) in masked rows cannot
            # propagate into the sum.  Do not turn this into diff * mask.
            row_ids = jax.lax.broadcasted_iota(jnp.int32, diff.shape, 0)
            diff = jnp.where(row_ids < tail_rows, diff, 0.0)
        return jnp.sum(diff, axis=0, keepdims=True)   # (1, LANES) lane partials

    if tail_rows != rows_per_tile:
        # Final tile is partial: only that grid step pays for the row mask.
        @pl.when(tile_idx == last_tile)
        def _acc_tail():
            acc_ref[...] += _partial_sum(mask_rows=True)

        full_pred = tile_idx != last_tile
        if has_phantom:
            full_pred = jnp.logical_and(full_pred, tile_idx < total_tiles)

        @pl.when(full_pred)
        def _acc_full():
            acc_ref[...] += _partial_sum(mask_rows=False)
    else:
        if has_phantom:
            @pl.when(tile_idx < total_tiles)
            def _acc_real():
                acc_ref[...] += _partial_sum(mask_rows=False)
        else:
            acc_ref[...] += _partial_sum(mask_rows=False)

    @pl.when(i == pl.num_programs(1) - 1)
    def _finalize():
        out_ref[...] = jnp.zeros_like(out_ref)
        out_ref[0:1, 0:1, :] = acc_ref[...].reshape(1, 1, LANES)


def mae_loss(outputs: jax.Array, targets: jax.Array, *, use_pallas=None) -> jax.Array:
    """Pallas MAE loss: mean(|outputs.flatten() - targets.flatten()|)."""
    o_flat = outputs.reshape(-1)
    t_flat = targets.reshape(-1)
    assert o_flat.shape == t_flat.shape, "outputs and targets must have same numel"
    n = o_flat.shape[0]
    assert n > 0, "empty inputs not supported"

    def _direct():
        return jnp.mean(jnp.abs(o_flat.astype(jnp.float32)
                                - t_flat.astype(jnp.float32)))

    main = (n // LANES) * LANES
    if use_pallas is None:
        use_pallas = n >= SMALL_N_FAST_PATH
    if not use_pallas or main == 0:
        # Small-n fast path: kernel launch overhead dominates below one tile.
        return _direct()

    tail = n - main
    rows = main // LANES

    if tail:
        # Ragged (<128-element) tail handled in the wrapper; avoids a full
        # padded HBM copy of both inputs.
        tail_sum = jnp.sum(jnp.abs(o_flat[main:].astype(jnp.float32)
                                   - t_flat[main:].astype(jnp.float32)))
        o_flat = o_flat[:main]
        t_flat = t_flat[:main]
    else:
        tail_sum = jnp.float32(0.0)

    o2 = o_flat.reshape(rows, LANES)   # free view when n % 128 == 0
    t2 = t_flat.reshape(rows, LANES)

    rows_per_tile = min(MAX_ROWS_PER_TILE, rows)
    total_tiles = -(-rows // rows_per_tile)
    # 2-way split only on chips with 2 TensorCores per device (v4/v5p/v7x);
    # on single-TC chips (v5e/v6e) the split is a pure-overhead serial loop.
    num_splits = 2 if (total_tiles >= 2 and _device_has_two_tensorcores()) else 1
    tiles_per_split = -(-total_tiles // num_splits)
    has_phantom = num_splits * tiles_per_split != total_tiles

    if has_phantom:
        # Clamp the phantom step's block index to the previous real tile so
        # the Pallas pipeline skips the re-fetch (DMA-free phantom step); its
        # contribution is skipped in-kernel via `tile_idx < total_tiles`.
        def in_map(s, i):
            return (jnp.minimum(s * tiles_per_split + i, total_tiles - 1), 0)
    else:
        def in_map(s, i):
            return (s * tiles_per_split + i, 0)

    kernel = functools.partial(
        _mae_kernel,
        rows=rows,
        rows_per_tile=rows_per_tile,
        tiles_per_split=tiles_per_split,
        total_tiles=total_tiles,
        has_phantom=has_phantom,
    )

    out_bytes = num_splits * 8 * LANES * 4
    cost = pl.CostEstimate(
        flops=3 * main,
        transcendentals=0,
        bytes_accessed=int(o2.size * o2.dtype.itemsize
                           + t2.size * t2.dtype.itemsize
                           + out_bytes),
    )

    partials = pl.pallas_call(
        kernel,
        out_shape=jax.ShapeDtypeStruct((num_splits, 8, LANES), jnp.float32),
        grid_spec=pltpu.PrefetchScalarGridSpec(
            num_scalar_prefetch=0,
            grid=(num_splits, tiles_per_split),
            in_specs=[
                pl.BlockSpec((rows_per_tile, LANES), in_map),
                pl.BlockSpec((rows_per_tile, LANES), in_map),
            ],
            out_specs=pl.BlockSpec((1, 8, LANES), lambda s, i: (s, 0, 0)),
            scratch_shapes=[pltpu.VMEM((1, LANES), jnp.float32)],
        ),
        compiler_params=pltpu.CompilerParams(
            dimension_semantics=("parallel", "arbitrary"),
            vmem_limit_bytes=VMEM_LIMIT_BYTES,
        ),
        cost_estimate=cost,
    )(o2, t2)

    return (jnp.sum(partials) + tail_sum) / jnp.float32(n)


if __name__ == "__main__":
    key = jax.random.PRNGKey(0)
    k1, k2 = jax.random.split(key)

    # Small shapes consistent with the module: NCHW prediction + flat target.
    outputs = jax.random.normal(k1, (2, 4, 16, 16), dtype=jnp.float32)
    targets = jax.random.normal(k2, (2 * 4 * 16 * 16,), dtype=jnp.float32)

    # Force the Pallas kernel even though this size is below the fast path.
    loss = mae_loss(outputs, targets, use_pallas=True)
    jax.block_until_ready(loss)
    ref = jnp.mean(jnp.abs(outputs.reshape(-1) - targets))
    assert jnp.allclose(loss, ref, rtol=1e-5, atol=1e-6), (loss, ref)

    # Auto path (small-n fast path) must match as well.
    loss_fast = mae_loss(outputs, targets)
    jax.block_until_ready(loss_fast)
    assert jnp.allclose(loss_fast, ref, rtol=1e-5, atol=1e-6), (loss_fast, ref)

    # Larger checks exercising multi-tile, partial last tile, odd-tile-count
    # (phantom step on 2-TC chips) and non-multiple-of-128 (ragged tail) paths.
    for extra_n in (3 * MAX_ROWS_PER_TILE * LANES,
                    2 * MAX_ROWS_PER_TILE * LANES + 1000 * LANES + 37):
        ka, kb = jax.random.split(jax.random.PRNGKey(extra_n % (2 ** 31 - 1)))
        a = jax.random.normal(ka, (extra_n,), dtype=jnp.float32)
        b = jax.random.normal(kb, (extra_n,), dtype=jnp.float32)
        got = mae_loss(a, b)
        jax.block_until_ready(got)
        want = jnp.mean(jnp.abs(a - b))
        assert jnp.allclose(got, want, rtol=1e-4, atol=1e-6), (extra_n, got, want)

    print("KERNEL_OK")
</pallas_src>

<mosaic_0001>
module attributes {stable_mosaic.version = 11 : i64} {
  func.func @_mae_kernel(%arg0: i32, %arg1: i32, %arg2: memref<16x128xf32, #tpu.memory_space<vmem>>, %arg3: memref<16x128xf32, #tpu.memory_space<vmem>>, %arg4: memref<1x8x128xf32, #tpu.memory_space<vmem>>, %arg5: memref<1x128xf32, #tpu.memory_space<vmem>>) attributes {dimension_semantics = [#tpu.dimension_semantics<parallel>, #tpu.dimension_semantics<arbitrary>], iteration_bounds = array<i64: 1, 1>, scalar_prefetch = 0 : i64, scratch_operands = 1 : i64, tpu.core_type = #tpu.core_type<tc>, window_params = [{transform_indices = @transform_0, window_bounds = array<i64: 16, 128>}, {transform_indices = @transform_1, window_bounds = array<i64: 16, 128>}, {transform_indices = @transform_2, window_bounds = array<i64: 1, 8, 128>}]} {
    %c0_i32 = arith.constant 0 : i32
    %0 = arith.cmpi eq, %arg1, %c0_i32 : i32
    %1 = arith.extui %0 : i1 to i32
    %c0_i32_0 = arith.constant 0 : i32
    %2 = arith.cmpi ne, %1, %c0_i32_0 : i32
    scf.if %2 {
      %cst_10 = arith.constant 0.000000e+00 : f32
      %15 = vector.broadcast %cst_10 : f32 to vector<1x128xf32>
      %c0_11 = arith.constant 0 : index
      %c0_12 = arith.constant 0 : index
      %16 = vector.load %arg5[%c0_11, %c0_12] : memref<1x128xf32, #tpu.memory_space<vmem>>, vector<1x128xf32>
      tpu.vector_store %arg5[%c0_11, %c0_12], %15 {strides = array<i32>} : memref<1x128xf32, #tpu.memory_space<vmem>>, vector<1x128xf32>,
    } else {
    }
    %c0 = arith.constant 0 : index
    %c0_1 = arith.constant 0 : index
    %3 = vector.load %arg5[%c0, %c0_1] : memref<1x128xf32, #tpu.memory_space<vmem>>, vector<1x128xf32>
    %c0_2 = arith.constant 0 : index
    %c0_3 = arith.constant 0 : index
    %4 = vector.load %arg2[%c0_2, %c0_3] : memref<16x128xf32, #tpu.memory_space<vmem>>, vector<16x128xf32>
    %c0_4 = arith.constant 0 : index
    %c0_5 = arith.constant 0 : index
    %5 = vector.load %arg3[%c0_4, %c0_5] : memref<16x128xf32, #tpu.memory_space<vmem>>, vector<16x128xf32>
    %6 = arith.subf %4, %5 : vector<16x128xf32>
    %7 = math.absf %6 : vector<16x128xf32>
    %cst = arith.constant dense<0.000000e+00> : vector<128xf32>
    %8 = vector.multi_reduction <add>, %7, %cst [0] : vector<16x128xf32> to vector<128xf32>
    %9 = vector.shape_cast %8 : vector<128xf32> to vector<1x128xf32>
    %10 = arith.addf %3, %9 : vector<1x128xf32>
    %c0_6 = arith.constant 0 : index
    %c0_7 = arith.constant 0 : index
    %11 = vector.load %arg5[%c0_6, %c0_7] : memref<1x128xf32, #tpu.memory_space<vmem>>, vector<1x128xf32>
    tpu.vector_store %arg5[%c0_6, %c0_7], %10 {strides = array<i32>} : memref<1x128xf32, #tpu.memory_space<vmem>>, vector<1x128xf32>,
    %c0_i32_8 = arith.constant 0 : i32
    %12 = arith.cmpi eq, %arg1, %c0_i32_8 : i32
    %13 = arith.extui %12 : i1 to i32
    %c0_i32_9 = arith.constant 0 : i32
    %14 = arith.cmpi ne, %13, %c0_i32_9 : i32
    scf.if %14 {
      %cst_10 = arith.constant 0.000000e+00 : f32
      %15 = vector.broadcast %cst_10 : f32 to vector<1x8x128xf32>
      %c0_11 = arith.constant 0 : index
      %c0_12 = arith.constant 0 : index
      %c0_13 = arith.constant 0 : index
      %16 = vector.load %arg4[%c0_11, %c0_12, %c0_13] : memref<1x8x128xf32, #tpu.memory_space<vmem>>, vector<1x8x128xf32>
      tpu.vector_store %arg4[%c0_11, %c0_12, %c0_13], %15 {strides = array<i32>} : memref<1x8x128xf32, #tpu.memory_space<vmem>>, vector<1x8x128xf32>,
      %c0_14 = arith.constant 0 : index
      %c0_15 = arith.constant 0 : index
      %17 = vector.load %arg5[%c0_14, %c0_15] : memref<1x128xf32, #tpu.memory_space<vmem>>, vector<1x128xf32>
      %18 = vector.shape_cast %17 : vector<1x128xf32> to vector<1x1x128xf32>
      %c0_16 = arith.constant 0 : index
      %c0_17 = arith.constant 0 : index
      %c0_18 = arith.constant 0 : index
      %19 = vector.load %arg4[%c0_16, %c0_17, %c0_18] : memref<1x8x128xf32, #tpu.memory_space<vmem>>, vector<1x1x128xf32>
      tpu.vector_store %arg4[%c0_16, %c0_17, %c0_18], %18 {strides = array<i32>} : memref<1x8x128xf32, #tpu.memory_space<vmem>>, vector<1x1x128xf32>,
    } else {
    }
    return
  }
  func.func @transform_0(%arg0: i32, %arg1: i32) -> (i32, i32) {
    %c1_i32 = arith.constant 1 : i32
    %0 = arith.muli %arg0, %c1_i32 : i32
    %1 = arith.addi %0, %arg1 : i32
    %c0_i32 = arith.constant 0 : i32
    %c0_i32_0 = arith.constant 0 : i32
    return %1, %c0_i32 : i32, i32
  }
  func.func @transform_1(%arg0: i32, %arg1: i32) -> (i32, i32) {
    %c1_i32 = arith.constant 1 : i32
    %0 = arith.muli %arg0, %c1_i32 : i32
    %1 = arith.addi %0, %arg1 : i32
    %c0_i32 = arith.constant 0 : i32
    %c0_i32_0 = arith.constant 0 : i32
    return %1, %c0_i32 : i32, i32
  }
  func.func @transform_2(%arg0: i32, %arg1: i32) -> (i32, i32, i32) {
    %c0_i32 = arith.constant 0 : i32
    %c0_i32_0 = arith.constant 0 : i32
    %c0_i32_1 = arith.constant 0 : i32
    return %arg0, %c0_i32, %c0_i32_0 : i32, i32, i32
  }
}

</mosaic_0001>

<llo_original>
// kernel: tpu_custom_call.1
$region0: #{tpu_custom_call.1}
  #allocation0 [shape = 'u32[]', space=smem, size = 0x4, offset = 0x4, fixed_abs, tag = 'smem constant byte address 0x4 - core index']
  #allocation1 [shape = 'u32[144,128]{1,0:T(1,128)}', space=vmem, size = 0x12000, scoped, tag = 'internal scratch']
  #allocation2 [shape = 'f32[1,128]{1,0:T(1,128)}', space=vmem, size = 0x200, scoped, tag = 'scratch operand']
  %s0 = inlined_call_operand.hbm [shape: f32[16,128], index: 0, kind: input, shape index: {}]
  %s1 = inlined_call_operand.hbm [shape: f32[16,128], index: 1, kind: input, shape index: {}]
  %s2 = inlined_call_operand.hbm [shape: f32[1,8,128], index: 2, kind: output, shape index: {}]
  %s3 = sld [smem:[#allocation0]]
  $region34: #{tpu_custom_call.1} parent=0
    _
  %s5 = ssub.s32 1, %s3
  %s6 = scalar_select 0, %s5, %s3
  $region1: #{tpu_custom_call.1} parent=0
    #allocation3 [shape = 'u8[8192]{0}', space=vmem, size = 0x2000, scoped, tag = 'input window, operand 0, single buffered']
    #allocation4 [shape = 's32[1]{0}', space=sflag, size = 0x4, scoped, tag = 'scoped memory for tpu_custom_call.1']
    #allocation5 [shape = 's32[1]{0}', space=sflag, size = 0x4, scoped, tag = 'scoped memory for tpu_custom_call.1']
    #allocation6 [shape = 'u8[8192]{0}', space=vmem, size = 0x2000, scoped, tag = 'input window, operand 1, single buffered']
    #allocation7 [shape = 's32[1]{0}', space=sflag, size = 0x4, scoped, tag = 'scoped memory for tpu_custom_call.1']
    #allocation8 [shape = 'u8[4096]{0}', space=vmem, size = 0x1000, scoped, tag = 'output window, operand 0, single buffered']
    %7 = vsyncpa [#allocation4], 0
    %8 = vsyncpa [#allocation7], 0
    %9 = vsyncpa [#allocation5], 0
    // Predicated region
    $region2: #{tpu_custom_call.1} parent=1 // pred_check
      _
    $region3: #{tpu_custom_call.1} parent=1 // pred_check_branch
      %11 = sbr.rel (0) target = $region5
    $region4: #{tpu_custom_call.1} parent=1 // pred_region
      %s12 = sadd.s32 0, 0
      %s13 = smul.u32 2, %s12
      %s15 = ssub.s32 256, 256
      %16 = vsyncadd [#allocation4], %s15
      %s17 = smul.addr %s13, 128
      %s18 = scalar_lea.hbm %s0, %s17
      %s19 = sshll.u32 [#allocation3], 4
      %s20 = int_to_ptr.vmem [resolvable:$true] %s19
      %25 = dma.hbm_to_vmem [thread:$0]  %s18, 256, %s20, [#allocation4], 128, 128, 8
    $region5: #{tpu_custom_call.1} parent=1 // pred_fallthru
      _
    // Predicated region
    $region6: #{tpu_custom_call.1} parent=1 // pred_check
      _
    $region7: #{tpu_custom_call.1} parent=1 // pred_check_branch
      %27 = sbr.rel (0) target = $region9
    $region8: #{tpu_custom_call.1} parent=1 // pred_region
      %s28 = sadd.s32 0, 0
      %s29 = smul.u32 2, %s28
      %s31 = ssub.s32 256, 256
      %32 = vsyncadd [#allocation7], %s31
      %s33 = smul.addr %s29, 128
      %s34 = scalar_lea.hbm %s1, %s33
      %s35 = sshll.u32 [#allocation6], 4
      %s36 = int_to_ptr.vmem [resolvable:$true] %s35
      %41 = dma.hbm_to_vmem [thread:$0]  %s34, 256, %s36, [#allocation7], 128, 128, 8
    $region9: #{tpu_custom_call.1} parent=1 // pred_fallthru
      _
    // Predicated region
    $region10: #{tpu_custom_call.1} parent=1 // pred_check
      _
    $region11: #{tpu_custom_call.1} parent=1 // pred_check_branch
      %43 = sbr.rel (0) target = $region13
    $region12: #{tpu_custom_call.1} parent=1 // pred_region
      %44 = dma.done [#allocation4], 256
    $region13: #{tpu_custom_call.1} parent=1 // pred_fallthru
      _
    // Predicated region
    $region14: #{tpu_custom_call.1} parent=1 // pred_check
      _
    $region15: #{tpu_custom_call.1} parent=1 // pred_check_branch
      %46 = sbr.rel (0) target = $region17
    $region16: #{tpu_custom_call.1} parent=1 // pred_region
      %47 = dma.done [#allocation7], 256
    $region17: #{tpu_custom_call.1} parent=1 // pred_fallthru
      _
    %s48 = sadd.s32 0, 0
    %s49 = smul.u32 2, %s48
    %s50 = sadd.s32 0, 0
    %s51 = smul.u32 2, %s50
    %p52 = scmp.eq.s32.totalorder 0, 0
    // Predicated region
    $region18: #{tpu_custom_call.1} parent=1 // pred_check
      %p53 = pneg %p52
    $region19: #{tpu_custom_call.1} parent=1 // pred_check_branch
      %55 = sbr.rel (%p53) target = $region21
    $region20: #{tpu_custom_call.1} parent=1 // pred_region
      %56 = vst [vmem:[#allocation2] sm:$0x1] 0.0
    $region21: #{tpu_custom_call.1} parent=1 // pred_fallthru
      _
    %v57 = vld [vmem:[#allocation2] sm:$0x1]
    %v58 = vld [vmem:[#allocation3] sm:$0xff]
    %v59 = vld [vmem:[#allocation3 + $0x8] sm:$0xff]
    %v60 = vld [vmem:[#allocation6] sm:$0xff]
    %v61 = vld [vmem:[#allocation6 + $0x8] sm:$0xff]
    %v62 = vsub.f32 %v58, %v60
    %v63 = vsub.f32 %v59, %v61
    %v64 = vand.u32 2147483647, %v62
    %v65 = vand.u32 2147483647, %v63
    %v66 = vadd.f32 %v64, %v65
    %v67 = vrot.slane %v66, 4
    %v68 = vadd.f32 %v66, %v67
    %v69 = vrot.slane %v68, 2
    %v70 = vadd.f32 %v68, %v69
    %v71 = vrot.slane %v70, 1
    %v72 = vadd.f32 %v70, %v71
    %v73 = vadd.f32 %v57, %v72
    %74 = vst [vmem:[#allocation2] sm:$0x1] %v73
    // Predicated region
    $region22: #{tpu_custom_call.1} parent=1 // pred_check
      %p75 = pneg %p52
    $region23: #{tpu_custom_call.1} parent=1 // pred_check_branch
      %77 = sbr.rel (%p75) target = $region25
    $region24: #{tpu_custom_call.1} parent=1 // pred_region
      %78 = vst [vmem:[#allocation8] sm:$0xff] 0.0
      %v79 = vld [vmem:[#allocation2] sm:$0x1]
      %80 = vst [vmem:[#allocation8] sm:$0x1] %v79
    $region25: #{tpu_custom_call.1} parent=1 // pred_fallthru
      _
    // Predicated region
    $region26: #{tpu_custom_call.1} parent=1 // pred_check
      _
    $region27: #{tpu_custom_call.1} parent=1 // pred_check_branch
      %82 = sbr.rel (0) target = $region29
    $region28: #{tpu_custom_call.1} parent=1 // pred_region
      %s84 = ssub.s32 128, 128
      %85 = vsyncadd [#allocation5], %s84
      %s87 = sshll.u32 [#allocation8], 4
      %s88 = int_to_ptr.vmem [resolvable:$true] %s87
      %90 = dma.vmem_to_hbm [thread:$0]  %s88, 128, %s2, [#allocation5]
    $region29: #{tpu_custom_call.1} parent=1 // pred_fallthru
      _
    // Predicated region
    $region30: #{tpu_custom_call.1} parent=1 // pred_check
      _
    $region31: #{tpu_custom_call.1} parent=1 // pred_check_branch
      %92 = sbr.rel (0) target = $region33
    $region32: #{tpu_custom_call.1} parent=1 // pred_region
      %93 = dma.done [#allocation5], 128
    $region33: #{tpu_custom_call.1} parent=1 // pred_fallthru
      _
    %94 = vsyncpa [#allocation4], 1
    %95 = vsyncpa [#allocation7], 1
    %96 = vsyncpa [#allocation5], 1

</llo_original>
